<compile_context>
chip_gen: v7x
topology: tpu7x:2x2x1
jax: 0.10.0
libtpu: 0.0.40
codegen_flags: <defaults>
</compile_context>

<pallas_src>
import functools

import jax
import jax.numpy as jnp
from jax import lax
from jax.experimental import pallas as pl
from jax.experimental.pallas import tpu as pltpu


def _alpha_ce_kernel(cos_ref, lab_ref, o_ref, *, alpha, tn):
    """Per-row alpha-weighted CE loss for one (TB, n) tile.

    Stable, m-factored form of the PyTorch math:
      pos   = cos[row, label[row]]
      lse   = m + log(l),  l = sum(exp(cos - m)),  m = max(cos)
      denom = alpha*exp(pos) + exp(lse) - exp(pos)
      loss  = log(denom) - pos - log(alpha)
            = m + log(l + (alpha - 1) * exp(pos - m)) - pos - log(alpha)
    Computed with an online (chunked) logsumexp over n so only one
    (TB, tn) f32 temp set is live at a time.
    """
    tb, n = cos_ref.shape
    labels = lab_ref[...]                                    # (TB, 1) int32

    def accumulate(chunk_f32, col_base, start, m, l, p):
        # Positive-score contribution (one-hot row gather, reuses cast chunk).
        hit = col_base == (labels - start)                   # (TB, w) bool
        p = p + jnp.sum(jnp.where(hit, chunk_f32, 0.0), axis=1, keepdims=True)
        # Online logsumexp update (only exp(chunk - m_new) hits the EUP).
        m_new = jnp.maximum(m, jnp.max(chunk_f32, axis=1, keepdims=True))
        l = l * jnp.exp(m - m_new) + jnp.sum(
            jnp.exp(chunk_f32 - m_new), axis=1, keepdims=True)
        return m_new, l, p

    m0 = jnp.full((tb, 1), -jnp.inf, jnp.float32)
    l0 = jnp.zeros((tb, 1), jnp.float32)
    p0 = jnp.zeros((tb, 1), jnp.float32)

    n_full = n // tn
    rem = n - n_full * tn

    if n_full > 0:
        # Hoisted out of the loop: JAX does not CSE broadcast_in_dim.
        col_full = lax.broadcasted_iota(jnp.int32, (tb, tn), 1)

        def body(c, carry):
            start = pl.multiple_of(c * tn, 128)              # tn % 128 == 0
            chunk = cos_ref[:, pl.ds(start, tn)].astype(jnp.float32)
            return accumulate(chunk, col_full, start, *carry)

        m, l, p = lax.fori_loop(0, n_full, body, (m0, l0, p0))
    else:
        m, l, p = m0, l0, p0

    if rem > 0:                                              # static tail chunk
        start = n_full * tn
        col_rem = lax.broadcasted_iota(jnp.int32, (tb, rem), 1)
        chunk = cos_ref[:, pl.ds(start, rem)].astype(jnp.float32)
        m, l, p = accumulate(chunk, col_rem, start, m, l, p)

    log_alpha = jnp.log(jnp.float32(alpha))
    per_row = m + jnp.log(l + (alpha - 1.0) * jnp.exp(p - m)) - p - log_alpha
    o_ref[...] = per_row.astype(o_ref.dtype)


def _choose_block_rows(b, n, dtype):
    """~8 MiB input-dtype slab per grid step, dtype-aligned sublane rounding."""
    itemsize = jnp.dtype(dtype).itemsize
    sub = max(8, 32 // max(itemsize, 1))       # 8 for f32, 16 for bf16, 32 for int8/fp8
    target_bytes = 8 << 20
    tb = (target_bytes // max(n * itemsize, 1)) // sub * sub
    tb = max(sub, min(4096, tb))
    b_ru = ((b + sub - 1) // sub) * sub
    return max(sub, min(tb, b_ru))


def _choose_chunk_cols(tb, n):
    """~2 MiB f32 per chunk temporary, 128-lane aligned, capped at 1024 lanes."""
    n_ru = ((n + 127) // 128) * 128
    tn = ((2 << 20) // max(tb * 4, 1)) // 128 * 128
    tn = max(128, min(1024, tn))
    return min(tn, n_ru)


def alpha_weighted_ce_loss(cos_sim, labels, alpha=1.0):
    """cos_sim: (b, n) float (f32 or bf16), labels: (b,) int -> scalar f32 loss."""
    if alpha <= 0.0:
        raise ValueError("alpha must be > 0 (log(alpha) is part of the loss).")
    b, n = cos_sim.shape
    # NOTE: labels must be in [0, n); out-of-range labels silently yield pos=0
    # (unlike torch.gather, which errors) -- validate upstream if needed.
    labels2 = labels.reshape(b, 1).astype(jnp.int32)

    tb = _choose_block_rows(b, n, cos_sim.dtype)
    tn = _choose_chunk_cols(tb, n)
    num_tiles = pl.cdiv(b, tb)

    per_row = pl.pallas_call(
        functools.partial(_alpha_ce_kernel, alpha=float(alpha), tn=tn),
        out_shape=jax.ShapeDtypeStruct((b, 1), jnp.float32),
        grid=(num_tiles,),
        in_specs=[
            pl.BlockSpec((tb, n), lambda i: (i, 0)),   # native dtype, cast in-kernel
            pl.BlockSpec((tb, 1), lambda i: (i, 0)),
        ],
        out_specs=pl.BlockSpec((tb, 1), lambda i: (i, 0)),
        compiler_params=pltpu.CompilerParams(
            dimension_semantics=("parallel",),         # v7x's 2 TCs split the batch
            vmem_limit_bytes=48 * 1024 * 1024,
        ),
    )(cos_sim, labels2)

    # Independent per-row partials; finish the mean with a tiny XLA reduce.
    # Only the first b rows are valid (ragged final block writes are clipped).
    return jnp.sum(per_row[:, 0]) / jnp.float32(b)


def _reference_loss(cos_sim, labels, alpha=1.0):
    cos = cos_sim.astype(jnp.float32)
    pos = jnp.take_along_axis(cos, labels[:, None].astype(jnp.int32), axis=1)[:, 0]
    sum_exp = jnp.exp(jax.scipy.special.logsumexp(cos, axis=1))
    adj = pos + jnp.log(jnp.float32(alpha))
    denom = jnp.exp(adj) + (sum_exp - jnp.exp(pos))
    return jnp.mean(jnp.log(denom) - adj)


if __name__ == "__main__":
    key = jax.random.PRNGKey(0)

    cases = [
        # (b, n, dtype, alpha, tol)
        (8, 128, jnp.float32, 1.0, 1e-4),      # baseline, tail-only path
        (13, 200, jnp.float32, 0.5, 1e-4),     # ragged batch, non-128 n, alpha < 1
        (16, 2200, jnp.float32, 2.0, 1e-4),    # exercises chunked fori_loop + tail
        (16, 200, jnp.bfloat16, 2.0, 1e-3),    # bf16 input, 16-row sublane alignment
    ]
    for idx, (b, n, dtype, alpha, tol) in enumerate(cases):
        k1, k2, key = jax.random.split(key, 3)
        cos_sim = (4.0 * jax.random.normal(k1, (b, n), dtype=jnp.float32)).astype(dtype)
        labels = jax.random.randint(k2, (b,), 0, n, dtype=jnp.int32)

        loss = jax.block_until_ready(
            alpha_weighted_ce_loss(cos_sim, labels, alpha=alpha))
        ref = jax.block_until_ready(
            _reference_loss(cos_sim, labels, alpha=alpha))
        assert jnp.allclose(loss, ref, atol=tol, rtol=tol), (idx, loss, ref)

    print("KERNEL_OK")
</pallas_src>

<mosaic_0001>
module attributes {stable_mosaic.version = 11 : i64} {
  func.func @_alpha_ce_kernel(%arg0: i32, %arg1: memref<8x128xf32, #tpu.memory_space<vmem>>, %arg2: memref<8x1xi32, #tpu.memory_space<vmem>>, %arg3: memref<8x1xf32, #tpu.memory_space<vmem>>) attributes {dimension_semantics = [#tpu.dimension_semantics<parallel>], iteration_bounds = array<i64: 1>, scalar_prefetch = 0 : i64, scratch_operands = 0 : i64, tpu.core_type = #tpu.core_type<tc>, window_params = [{transform_indices = @transform_0, window_bounds = array<i64: 8, 128>}, {transform_indices = @transform_1, window_bounds = array<i64: 8, 1>}, {transform_indices = @transform_2, window_bounds = array<i64: 8, 1>}]} {
    %c0 = arith.constant 0 : index
    %c0_0 = arith.constant 0 : index
    %0 = vector.load %arg2[%c0, %c0_0] : memref<8x1xi32, #tpu.memory_space<vmem>>, vector<8x1xi32>
    %cst = arith.constant 0xFF800000 : f32
    %1 = vector.broadcast %cst : f32 to vector<8x1xf32>
    %cst_1 = arith.constant 0.000000e+00 : f32
    %2 = vector.broadcast %cst_1 : f32 to vector<8x1xf32>
    %cst_2 = arith.constant 0.000000e+00 : f32
    %3 = vector.broadcast %cst_2 : f32 to vector<8x1xf32>
    %4 = tpu.iota {dimensions = array<i32: 1>} : vector<8x128xi32>
    %c0_i32 = arith.constant 0 : i32
    %c128_i32 = arith.constant 128 : i32
    %5 = arith.muli %c0_i32, %c128_i32 : i32
    %6 = tpu.assume_multiple %5, 128 : i32
    %c0_3 = arith.constant 0 : index
    %7 = arith.index_cast %6 : i32 to index
    %8 = vector.load %arg1[%c0_3, %7] : memref<8x128xf32, #tpu.memory_space<vmem>>, vector<8x128xf32>
    %9 = vector.broadcast %6 : i32 to vector<8x1xi32>
    %10 = arith.subi %0, %9 : vector<8x1xi32>
    %11 = vector.broadcast %10 : vector<8x1xi32> to vector<8x128xi32>
    %12 = arith.cmpi eq, %4, %11 : vector<8x128xi32>
    %cst_4 = arith.constant 0.000000e+00 : f32
    %13 = vector.broadcast %cst_4 : f32 to vector<8x128xf32>
    %14 = arith.select %12, %8, %13 : vector<8x128xi1>, vector<8x128xf32>
    %cst_5 = arith.constant dense<0.000000e+00> : vector<8xf32>
    %15 = vector.multi_reduction <add>, %14, %cst_5 [1] : vector<8x128xf32> to vector<8xf32>
    %16 = vector.shape_cast %15 : vector<8xf32> to vector<8x1xf32>
    %17 = arith.addf %3, %16 : vector<8x1xf32>
    %cst_6 = arith.constant dense<0xFF800000> : vector<8xf32>
    %18 = vector.multi_reduction <maximumf>, %8, %cst_6 [1] : vector<8x128xf32> to vector<8xf32>
    %19 = vector.shape_cast %18 : vector<8xf32> to vector<8x1xf32>
    %20 = arith.maximumf %1, %19 : vector<8x1xf32>
    %21 = arith.subf %1, %20 : vector<8x1xf32>
    %22 = math.exp %21 : vector<8x1xf32>
    %23 = arith.mulf %2, %22 : vector<8x1xf32>
    %24 = vector.broadcast %20 : vector<8x1xf32> to vector<8x128xf32>
    %25 = arith.subf %8, %24 : vector<8x128xf32>
    %26 = math.exp %25 : vector<8x128xf32>
    %cst_7 = arith.constant dense<0.000000e+00> : vector<8xf32>
    %27 = vector.multi_reduction <add>, %26, %cst_7 [1] : vector<8x128xf32> to vector<8xf32>
    %28 = vector.shape_cast %27 : vector<8xf32> to vector<8x1xf32>
    %29 = arith.addf %23, %28 : vector<8x1xf32>
    %c1_i32 = arith.constant 1 : i32
    %cst_8 = arith.constant 1.000000e+00 : f32
    %30 = math.log %cst_8 : f32
    %31 = arith.subf %17, %20 : vector<8x1xf32>
    %32 = math.exp %31 : vector<8x1xf32>
    %cst_9 = arith.constant 0.000000e+00 : f32
    %33 = vector.broadcast %cst_9 : f32 to vector<8x1xf32>
    %34 = arith.mulf %33, %32 : vector<8x1xf32>
    %35 = arith.addf %29, %34 : vector<8x1xf32>
    %36 = math.log %35 : vector<8x1xf32>
    %37 = arith.addf %20, %36 : vector<8x1xf32>
    %38 = arith.subf %37, %17 : vector<8x1xf32>
    %39 = vector.broadcast %30 : f32 to vector<8x1xf32>
    %40 = arith.subf %38, %39 : vector<8x1xf32>
    %c0_10 = arith.constant 0 : index
    %c0_11 = arith.constant 0 : index
    %41 = vector.load %arg3[%c0_10, %c0_11] : memref<8x1xf32, #tpu.memory_space<vmem>>, vector<8x1xf32>
    tpu.vector_store %arg3[%c0_10, %c0_11], %40 {strides = array<i32>} : memref<8x1xf32, #tpu.memory_space<vmem>>, vector<8x1xf32>,
    return
  }
  func.func @transform_0(%arg0: i32) -> (i32, i32) {
    %c0_i32 = arith.constant 0 : i32
    %c0_i32_0 = arith.constant 0 : i32
    return %arg0, %c0_i32 : i32, i32
  }
  func.func @transform_1(%arg0: i32) -> (i32, i32) {
    %c0_i32 = arith.constant 0 : i32
    %c0_i32_0 = arith.constant 0 : i32
    return %arg0, %c0_i32 : i32, i32
  }
  func.func @transform_2(%arg0: i32) -> (i32, i32) {
    %c0_i32 = arith.constant 0 : i32
    %c0_i32_0 = arith.constant 0 : i32
    return %arg0, %c0_i32 : i32, i32
  }
}

</mosaic_0001>

<llo_original>
// kernel: tpu_custom_call.1
$region0: #{tpu_custom_call.1}
  #allocation0 [shape = 'u32[]', space=smem, size = 0x4, offset = 0x4, fixed_abs, tag = 'smem constant byte address 0x4 - core index']
  #allocation1 [shape = 'u32[144,128]{1,0:T(1,128)}', space=vmem, size = 0x12000, scoped, tag = 'internal scratch']
  %s0 = inlined_call_operand.vmem [shape: f32[8,128], index: 0, kind: input, shape index: {}]
  %s1 = inlined_call_operand.vmem [shape: s32[8,1], index: 1, kind: input, shape index: {}]
  %s2 = inlined_call_operand.vmem [shape: f32[8,1], index: 2, kind: output, shape index: {}]
  %s3 = sld [smem:[#allocation0]]
  $region18: #{tpu_custom_call.1} parent=0
    _
  %s5 = ssub.s32 1, %s3
  %s6 = scalar_select 0, %s5, %s3
  // Predicated region
  $region2: #{tpu_custom_call.1} parent=0 // pred_check
    _
  $region3: #{tpu_custom_call.1} parent=0 // pred_check_branch
    %8 = sbr.rel (0) target = $region5
  $region4: #{tpu_custom_call.1} parent=0 // pred_region
    _
  $region5: #{tpu_custom_call.1} parent=0 // pred_fallthru
    _
  // Predicated region
  $region6: #{tpu_custom_call.1} parent=0 // pred_check
    _
  $region7: #{tpu_custom_call.1} parent=0 // pred_check_branch
    %10 = sbr.rel (0) target = $region9
  $region8: #{tpu_custom_call.1} parent=0 // pred_region
    _
  $region9: #{tpu_custom_call.1} parent=0 // pred_fallthru
    _
  %v11 = vld [vmem:[%s1] sm:$0xff]
  %v12 = vlaneseq
  %v13 = vand.u32 %v12, 127
  %v14 = vld [vmem:[%s0] sm:$0xff]
  %v15 = vstv 0
  %v16 = vsub.s32 %v11, %v15
  %17 = vset.pattern.permute.xlu0 0
  %18 = vperm.xlu0 %17, %v16
  %v19 = vpop.permute.xlu0 %18
  %vm20 = vcmp.eq.s32.totalorder %v13, %v19
  %v21 = vsel %vm20, %v14, 0.0
  %22 = vadd.xlane.f32.xlu0 %v21
  %v23 = vpop.xlane.xlu0 %22
  %v24 = vadd.f32 %v23, 0.0
  %25 = vmax.xlane.f32.xlu0 %v14
  %v26 = vpop.xlane.xlu0 %25
  %v27 = vsub.f32 -inf, %v26
  %v28 = vmul.f32 %v27, 1.442695
  %v29 = vpow.pop %v28
  %v30 = vmul.f32 %v29, 0.0
  %v31 = vsub.f32 %v14, %v26
  %v32 = vmul.f32 %v31, 1.442695
  %v33 = vpow.pop %v32
  %34 = vadd.xlane.f32.xlu0 %v33
  %v35 = vpop.xlane.xlu0 %34
  %v36 = vadd.f32 %v30, %v35
  %v37 = vsub.f32 %v24, %v26
  %v38 = vmul.f32 %v37, 1.442695
  %v39 = vpow.pop %v38
  %v40 = vmul.f32 %v39, 0.0
  %v41 = vadd.f32 %v36, %v40
  %v42 = vlog2.pop %v41
  %v43 = vmul.f32 %v42, 0.6931472
  %v44 = vadd.f32 %v26, %v43
  %v45 = vsub.f32 %v44, %v24
  %vm46 = vcmask 7168
  %47 = vst.msk [vmem:[%s2] sm:$0xff] %vm46, %v45
  // Predicated region
  $region10: #{tpu_custom_call.1} parent=0 // pred_check
    _
  $region11: #{tpu_custom_call.1} parent=0 // pred_check_branch
    %49 = sbr.rel (0) target = $region13
  $region12: #{tpu_custom_call.1} parent=0 // pred_region
    _
  $region13: #{tpu_custom_call.1} parent=0 // pred_fallthru
    _
  // Predicated region
  $region14: #{tpu_custom_call.1} parent=0 // pred_check
    _
  $region15: #{tpu_custom_call.1} parent=0 // pred_check_branch
    %51 = sbr.rel (0) target = $region17
  $region16: #{tpu_custom_call.1} parent=0 // pred_region
    _
  $region17: #{tpu_custom_call.1} parent=0 // pred_fallthru
    _

</llo_original>
